<compile_context>
chip_gen: v7x
topology: tpu7x:2x2x1
jax: 0.10.0
libtpu: 0.0.40
codegen_flags: <defaults>
</compile_context>

<pallas_src>
import functools

import numpy as np
import jax
import jax.numpy as jnp
from jax.experimental import pallas as pl
from jax.experimental.pallas import tpu as pltpu

LANES = 128


def _round_up(x, m):
    return (x + m - 1) // m * m


def _custom_loss_kernel(out_ref, tgt_ref, skip_ref, loss_ref, ce_ref, acc_ref,
                        *, inv_n, inv_nc, inv_skip_count, valid_rows,
                        tile_rows, needs_mask):
    step = pl.program_id(0)

    @pl.when(step == 0)
    def _():
        # ---- cross entropy (mean) + L2 component, once, overlapping the
        #      skip-tile DMA pipeline ----
        x = out_ref[...].astype(jnp.float32)                       # (N, C)
        n, c = x.shape
        m = jnp.max(x, axis=-1, keepdims=True)
        shifted = x - m
        lse = jnp.log(jnp.sum(jnp.exp(shifted), axis=-1, keepdims=True))
        tgt = tgt_ref[...]                                          # (N, 1) int32
        col = jax.lax.broadcasted_iota(jnp.int32, (n, c), 1)
        onehot = (col == tgt).astype(jnp.float32)
        # -sum(onehot * (shifted - lse)) == sum(lse) - sum(onehot * shifted)
        ce_loss = (jnp.sum(lse) - jnp.sum(onehot * shifted)) * inv_n
        l2_component = jnp.sum(x * x) * inv_nc
        ce_ref[0] = ce_loss + 0.001 * l2_component
        acc_ref[...] = jnp.zeros_like(acc_ref)

    # ---- skip component: vector-accumulate this tile (lane pad is zeros;
    #      ragged last block masked so unspecified edge content is dropped) ----
    tile = skip_ref[...].astype(jnp.float32)                        # (tile_rows, 128)
    if needs_mask:
        row = jax.lax.broadcasted_iota(jnp.int32, tile.shape, 0) + step * tile_rows
        tile = jnp.where(row < valid_rows, tile, 0.0)
    acc_ref[...] += jnp.sum(tile, axis=0, keepdims=True)            # (1, 128)

    @pl.when(step == pl.num_programs(0) - 1)
    def _():
        skip_mean = jnp.sum(acc_ref[...]) * inv_skip_count
        loss_ref[0, 0] = ce_ref[0] + 0.005 * skip_mean


def custom_loss(outputs, targets, skip_connections, skip_index, *,
                skip_tile_rows=1024):
    """Pallas equivalent of CustomLoss.forward (skip_index chosen by caller)."""
    N, C = outputs.shape
    targets2d = targets.astype(jnp.int32).reshape(N, 1)

    skip = skip_connections[skip_index]
    skip_count = float(skip.size)                 # true (unpadded) element count

    # lane-dense layout: flatten to (-1, 128); zero-pad only the lane tail
    flat = skip.reshape(-1)
    lane_pad = (-flat.shape[0]) % LANES
    if lane_pad:
        flat = jnp.pad(flat, (0, lane_pad))
    rows = flat.shape[0] // LANES
    skip2d = flat.reshape(rows, LANES)

    # sublane-aligned tile; ragged last block handled in-kernel (no row pad copy)
    tile_rows = min(_round_up(skip_tile_rows, 8), _round_up(rows, 8))
    num_tiles = (rows + tile_rows - 1) // tile_rows
    needs_mask = (rows % tile_rows) != 0

    kernel = functools.partial(
        _custom_loss_kernel,
        inv_n=1.0 / N,
        inv_nc=1.0 / (N * C),
        inv_skip_count=1.0 / skip_count,
        valid_rows=rows,
        tile_rows=tile_rows,
        needs_mask=needs_mask,
    )

    loss = pl.pallas_call(
        kernel,
        out_shape=jax.ShapeDtypeStruct((1, 1), jnp.float32),
        grid_spec=pltpu.PrefetchScalarGridSpec(
            num_scalar_prefetch=0,
            grid=(num_tiles,),
            in_specs=[
                # logits & targets: same block every step -> resident in VMEM
                pl.BlockSpec((N, C), lambda i: (0, 0)),
                pl.BlockSpec((N, 1), lambda i: (0, 0)),
                # skip: streamed lane-dense tiles, double-buffered by Pallas
                pl.BlockSpec((tile_rows, LANES), lambda i: (i, 0)),
            ],
            out_specs=pl.BlockSpec((1, 1), lambda i: (0, 0),
                                   memory_space=pltpu.MemorySpace.SMEM),
            scratch_shapes=[
                pltpu.SMEM((1,), jnp.float32),        # ce + l2 scalar
                pltpu.VMEM((1, LANES), jnp.float32),  # skip lane-partial sums
            ],
        ),
        compiler_params=pltpu.CompilerParams(
            dimension_semantics=("arbitrary",),       # accumulation axis
            vmem_limit_bytes=32 * 1024 * 1024,        # safe on v5e/v6e/v7x
        ),
    )(outputs, targets2d, skip2d)
    return loss[0, 0]


def _reference(outputs, targets, skip_connections, skip_index):
    """Pure-JAX reference for a sanity check."""
    x = outputs.astype(jnp.float32)
    logp = jax.nn.log_softmax(x, axis=-1)
    ce = -jnp.mean(jnp.take_along_axis(
        logp, targets[:, None].astype(jnp.int32), axis=1))
    skip_mean = jnp.mean(skip_connections[skip_index].astype(jnp.float32))
    l2 = jnp.mean(x * x)
    return ce + 0.005 * skip_mean + 0.001 * l2


if __name__ == "__main__":
    key = jax.random.PRNGKey(0)
    k_out, k_tgt, k_s0, k_s1, k_s2 = jax.random.split(key, 5)

    N, C = 8, 32  # batch, num classes
    outputs = jax.random.normal(k_out, (N, C), dtype=jnp.float32)
    targets = jax.random.randint(k_tgt, (N,), 0, C, dtype=jnp.int32)

    # skip connections: NCHW feature maps from a hypothetical encoder
    # (last one intentionally non-multiple of 128 elements to exercise the
    #  lane-pad + ragged-row-mask path)
    skip_connections = [
        jax.random.normal(k_s0, (2, 4, 16, 16), dtype=jnp.float32),
        jax.random.normal(k_s1, (2, 8, 8, 8), dtype=jnp.float32),
        jax.random.normal(k_s2, (2, 5, 7, 9), dtype=jnp.float32),
    ]

    # host-side random index selection (mirrors np.random.randint), seeded
    rng = np.random.default_rng(0)
    skip_index = int(rng.integers(0, len(skip_connections)))

    # 1) default tile size, every skip index (incl. ragged/masked path)
    for idx in range(len(skip_connections)):
        loss = custom_loss(outputs, targets, skip_connections, idx)
        loss = jax.block_until_ready(loss)
        ref = _reference(outputs, targets, skip_connections, idx)
        assert jnp.allclose(loss, ref, rtol=1e-5, atol=1e-5), (idx, loss, ref)

    # 2) small tiles on the larger skip map to exercise the multi-tile
    #    accumulation path (16 rows / 8-row tiles -> 2 grid steps)
    loss_tiled = custom_loss(outputs, targets, skip_connections, 0,
                             skip_tile_rows=8)
    loss_tiled = jax.block_until_ready(loss_tiled)
    ref_tiled = _reference(outputs, targets, skip_connections, 0)
    assert jnp.allclose(loss_tiled, ref_tiled, rtol=1e-5, atol=1e-5), (
        loss_tiled, ref_tiled)

    # 3) the host-randomly-selected index (matches the PyTorch module's draw)
    loss_rnd = custom_loss(outputs, targets, skip_connections, skip_index)
    loss_rnd = jax.block_until_ready(loss_rnd)
    ref_rnd = _reference(outputs, targets, skip_connections, skip_index)
    assert jnp.allclose(loss_rnd, ref_rnd, rtol=1e-5, atol=1e-5), (loss_rnd, ref_rnd)

    print("KERNEL_OK")
</pallas_src>

<mosaic_0001>
module attributes {stable_mosaic.version = 11 : i64} {
  func.func @_custom_loss_kernel(%arg0: i32, %arg1: memref<8x32xf32, #tpu.memory_space<vmem>>, %arg2: memref<8x1xi32, #tpu.memory_space<vmem>>, %arg3: memref<16x128xf32, #tpu.memory_space<vmem>>, %arg4: memref<1x1xf32, #tpu.memory_space<smem>>, %arg5: memref<1xf32, #tpu.memory_space<smem>>, %arg6: memref<1x128xf32, #tpu.memory_space<vmem>>) attributes {dimension_semantics = [#tpu.dimension_semantics<arbitrary>], iteration_bounds = array<i64: 1>, scalar_prefetch = 0 : i64, scratch_operands = 2 : i64, tpu.core_type = #tpu.core_type<tc>, window_params = [{pipeline_mode = #tpu.pipeline_mode<synchronous>, transform_indices = @transform_0, window_bounds = array<i64: 8, 32>}, {pipeline_mode = #tpu.pipeline_mode<synchronous>, transform_indices = @transform_1, window_bounds = array<i64: 8, 1>}, {transform_indices = @transform_2, window_bounds = array<i64: 16, 128>}, {transform_indices = @transform_3, window_bounds = array<i64: 1, 1>}]} {
    %c0_i32 = arith.constant 0 : i32
    %0 = arith.cmpi eq, %arg0, %c0_i32 : i32
    %1 = arith.extui %0 : i1 to i32
    %c0_i32_0 = arith.constant 0 : i32
    %2 = arith.cmpi ne, %1, %c0_i32_0 : i32
    scf.if %2 {
      %c0_8 = arith.constant 0 : index
      %c0_9 = arith.constant 0 : index
      %12 = vector.load %arg1[%c0_8, %c0_9] : memref<8x32xf32, #tpu.memory_space<vmem>>, vector<8x32xf32>
      %cst_10 = arith.constant dense<0xFF800000> : vector<8xf32>
      %13 = vector.multi_reduction <maximumf>, %12, %cst_10 [1] : vector<8x32xf32> to vector<8xf32>
      %14 = vector.shape_cast %13 : vector<8xf32> to vector<8x1xf32>
      %15 = vector.broadcast %14 : vector<8x1xf32> to vector<8x32xf32>
      %16 = arith.subf %12, %15 : vector<8x32xf32>
      %17 = math.exp %16 : vector<8x32xf32>
      %cst_11 = arith.constant dense<0.000000e+00> : vector<8xf32>
      %18 = vector.multi_reduction <add>, %17, %cst_11 [1] : vector<8x32xf32> to vector<8xf32>
      %19 = vector.shape_cast %18 : vector<8xf32> to vector<8x1xf32>
      %20 = math.log %19 : vector<8x1xf32>
      %c0_12 = arith.constant 0 : index
      %c0_13 = arith.constant 0 : index
      %21 = vector.load %arg2[%c0_12, %c0_13] : memref<8x1xi32, #tpu.memory_space<vmem>>, vector<8x1xi32>
      %22 = tpu.iota {dimensions = array<i32: 1>} : vector<8x32xi32>
      %23 = vector.broadcast %21 : vector<8x1xi32> to vector<8x32xi32>
      %24 = arith.cmpi eq, %22, %23 : vector<8x32xi32>
      %25 = arith.extui %24 : vector<8x32xi1> to vector<8x32xi32>
      %26 = arith.sitofp %25 : vector<8x32xi32> to vector<8x32xf32>
      %27 = vector.shape_cast %20 : vector<8x1xf32> to vector<1x8x1xf32>
      %cst_14 = arith.constant dense<0.000000e+00> : vector<1xf32>
      %28 = vector.multi_reduction <add>, %27, %cst_14 [1, 2] : vector<1x8x1xf32> to vector<1xf32>
      %29 = vector.shape_cast %28 : vector<1xf32> to vector<1x1x1xf32>
      %30 = vector.extract %29[0, 0, 0] : f32 from vector<1x1x1xf32>
      %31 = arith.mulf %26, %16 : vector<8x32xf32>
      %32 = vector.shape_cast %31 : vector<8x32xf32> to vector<1x8x32xf32>
      %cst_15 = arith.constant dense<0.000000e+00> : vector<1xf32>
      %33 = vector.multi_reduction <add>, %32, %cst_15 [1, 2] : vector<1x8x32xf32> to vector<1xf32>
      %34 = vector.shape_cast %33 : vector<1xf32> to vector<1x1x1xf32>
      %35 = vector.extract %34[0, 0, 0] : f32 from vector<1x1x1xf32>
      %36 = arith.subf %30, %35 : f32
      %cst_16 = arith.constant 1.250000e-01 : f32
      %37 = arith.mulf %36, %cst_16 : f32
      %38 = arith.mulf %12, %12 : vector<8x32xf32>
      %39 = vector.shape_cast %38 : vector<8x32xf32> to vector<1x8x32xf32>
      %cst_17 = arith.constant dense<0.000000e+00> : vector<1xf32>
      %40 = vector.multi_reduction <add>, %39, %cst_17 [1, 2] : vector<1x8x32xf32> to vector<1xf32>
      %41 = vector.shape_cast %40 : vector<1xf32> to vector<1x1x1xf32>
      %42 = vector.extract %41[0, 0, 0] : f32 from vector<1x1x1xf32>
      %cst_18 = arith.constant 3.906250e-03 : f32
      %43 = arith.mulf %42, %cst_18 : f32
      %cst_19 = arith.constant 1.000000e-03 : f32
      %44 = arith.mulf %cst_19, %43 : f32
      %45 = arith.addf %37, %44 : f32
      %c0_20 = arith.constant 0 : index
      %46 = memref.load %arg5[%c0_20] : memref<1xf32, #tpu.memory_space<smem>>
      memref.store %45, %arg5[%c0_20] : memref<1xf32, #tpu.memory_space<smem>>
      %cst_21 = arith.constant 0.000000e+00 : f32
      %47 = vector.broadcast %cst_21 : f32 to vector<1x128xf32>
      %c0_22 = arith.constant 0 : index
      %c0_23 = arith.constant 0 : index
      %48 = vector.load %arg6[%c0_22, %c0_23] : memref<1x128xf32, #tpu.memory_space<vmem>>, vector<1x128xf32>
      tpu.vector_store %arg6[%c0_22, %c0_23], %47 {strides = array<i32>} : memref<1x128xf32, #tpu.memory_space<vmem>>, vector<1x128xf32>,
    } else {
    }
    %c0 = arith.constant 0 : index
    %c0_1 = arith.constant 0 : index
    %3 = vector.load %arg3[%c0, %c0_1] : memref<16x128xf32, #tpu.memory_space<vmem>>, vector<16x128xf32>
    %c0_2 = arith.constant 0 : index
    %c0_3 = arith.constant 0 : index
    %4 = vector.load %arg6[%c0_2, %c0_3] : memref<1x128xf32, #tpu.memory_space<vmem>>, vector<1x128xf32>
    %cst = arith.constant dense<0.000000e+00> : vector<128xf32>
    %5 = vector.multi_reduction <add>, %3, %cst [0] : vector<16x128xf32> to vector<128xf32>
    %6 = vector.shape_cast %5 : vector<128xf32> to vector<1x128xf32>
    %7 = arith.addf %4, %6 : vector<1x128xf32>
    %c0_4 = arith.constant 0 : index
    %c0_5 = arith.constant 0 : index
    %8 = vector.load %arg6[%c0_4, %c0_5] : memref<1x128xf32, #tpu.memory_space<vmem>>, vector<1x128xf32>
    tpu.vector_store %arg6[%c0_4, %c0_5], %7 {strides = array<i32>} : memref<1x128xf32, #tpu.memory_space<vmem>>, vector<1x128xf32>,
    %c0_i32_6 = arith.constant 0 : i32
    %9 = arith.cmpi eq, %arg0, %c0_i32_6 : i32
    %10 = arith.extui %9 : i1 to i32
    %c0_i32_7 = arith.constant 0 : i32
    %11 = arith.cmpi ne, %10, %c0_i32_7 : i32
    scf.if %11 {
      %c0_8 = arith.constant 0 : index
      %c0_9 = arith.constant 0 : index
      %12 = vector.load %arg6[%c0_8, %c0_9] : memref<1x128xf32, #tpu.memory_space<vmem>>, vector<1x128xf32>
      %13 = vector.shape_cast %12 : vector<1x128xf32> to vector<1x1x128xf32>
      %cst_10 = arith.constant dense<0.000000e+00> : vector<1xf32>
      %14 = vector.multi_reduction <add>, %13, %cst_10 [1, 2] : vector<1x1x128xf32> to vector<1xf32>
      %15 = vector.shape_cast %14 : vector<1xf32> to vector<1x1x1xf32>
      %16 = vector.extract %15[0, 0, 0] : f32 from vector<1x1x1xf32>
      %cst_11 = arith.constant 4.8828125E-4 : f32
      %17 = arith.mulf %16, %cst_11 : f32
      %c0_12 = arith.constant 0 : index
      %18 = memref.load %arg5[%c0_12] : memref<1xf32, #tpu.memory_space<smem>>
      %cst_13 = arith.constant 5.000000e-03 : f32
      %19 = arith.mulf %cst_13, %17 : f32
      %20 = arith.addf %18, %19 : f32
      %c0_14 = arith.constant 0 : index
      %c0_15 = arith.constant 0 : index
      %21 = memref.load %arg4[%c0_14, %c0_15] : memref<1x1xf32, #tpu.memory_space<smem>>
      memref.store %20, %arg4[%c0_14, %c0_15] : memref<1x1xf32, #tpu.memory_space<smem>>
    } else {
    }
    return
  }
  func.func @transform_0(%arg0: i32) -> (i32, i32) {
    %c0_i32 = arith.constant 0 : i32
    %c0_i32_0 = arith.constant 0 : i32
    %c0_i32_1 = arith.constant 0 : i32
    return %c0_i32, %c0_i32_0 : i32, i32
  }
  func.func @transform_1(%arg0: i32) -> (i32, i32) {
    %c0_i32 = arith.constant 0 : i32
    %c0_i32_0 = arith.constant 0 : i32
    %c0_i32_1 = arith.constant 0 : i32
    return %c0_i32, %c0_i32_0 : i32, i32
  }
  func.func @transform_2(%arg0: i32) -> (i32, i32) {
    %c0_i32 = arith.constant 0 : i32
    %c0_i32_0 = arith.constant 0 : i32
    return %arg0, %c0_i32 : i32, i32
  }
  func.func @transform_3(%arg0: i32) -> (i32, i32) {
    %c0_i32 = arith.constant 0 : i32
    %c0_i32_0 = arith.constant 0 : i32
    %c0_i32_1 = arith.constant 0 : i32
    return %c0_i32, %c0_i32_0 : i32, i32
  }
}

</mosaic_0001>

<llo_original>
// kernel: tpu_custom_call.1
$region0: #{tpu_custom_call.1}
  #allocation0 [shape = 'u32[]', space=smem, size = 0x4, offset = 0x4, fixed_abs, tag = 'smem constant byte address 0x4 - core index']
  #allocation1 [shape = 'u32[144,128]{1,0:T(1,128)}', space=vmem, size = 0x12000, scoped, tag = 'internal scratch']
  #allocation2 [shape = 'f32[1]{0:T(128)}', space=smem, size = 0x200, scoped, tag = 'scratch operand']
  #allocation3 [shape = 'f32[1,128]{1,0:T(1,128)}', space=vmem, size = 0x200, scoped, tag = 'scratch operand']
  %s0 = inlined_call_operand.hbm [shape: f32[8,32], index: 0, kind: input, shape index: {}]
  %s1 = inlined_call_operand.vmem [shape: s32[8,1], index: 1, kind: input, shape index: {}]
  %s2 = inlined_call_operand.vmem [shape: f32[16,128], index: 2, kind: input, shape index: {}]
  %s3 = inlined_call_operand.hbm [shape: f32[1,1], index: 3, kind: output, shape index: {}]
  %s4 = sld [smem:[#allocation0]]
  $region34: #{tpu_custom_call.1} parent=0
    _
  %s6 = ssub.s32 1, %s4
  %s7 = scalar_select 0, %s6, %s4
  $region1: #{tpu_custom_call.1} parent=0
    #allocation4 [shape = 'u8[4096]{0}', space=vmem, size = 0x1000, scoped, tag = 'input window, operand 0, single buffered']
    #allocation5 [shape = 's32[1]{0}', space=sflag, size = 0x4, scoped, tag = 'scoped memory for tpu_custom_call.1']
    #allocation6 [shape = 's32[1]{0}', space=sflag, size = 0x4, scoped, tag = 'scoped memory for tpu_custom_call.1']
    #allocation7 [shape = 'u8[512]{0}', space=smem, size = 0x200, scoped, tag = 'output window, operand 0, single buffered']
    %8 = vsyncpa [#allocation5], 0
    %9 = vsyncpa [#allocation6], 0
    // Predicated region
    $region2: #{tpu_custom_call.1} parent=1 // pred_check
      _
    $region3: #{tpu_custom_call.1} parent=1 // pred_check_branch
      %11 = sbr.rel (0) target = $region5
    $region4: #{tpu_custom_call.1} parent=1 // pred_region
      %s13 = ssub.s32 128, 128
      %14 = vsyncadd [#allocation5], %s13
      %s16 = sshll.u32 [#allocation4], 4
      %s17 = int_to_ptr.vmem [resolvable:$true] %s16
      %19 = dma.hbm_to_vmem [thread:$0]  %s0, 128, %s17, [#allocation5]
    $region5: #{tpu_custom_call.1} parent=1 // pred_fallthru
      _
    // Predicated region
    $region6: #{tpu_custom_call.1} parent=1 // pred_check
      _
    $region7: #{tpu_custom_call.1} parent=1 // pred_check_branch
      %21 = sbr.rel (0) target = $region9
    $region8: #{tpu_custom_call.1} parent=1 // pred_region
      _
    $region9: #{tpu_custom_call.1} parent=1 // pred_fallthru
      _
    // Predicated region
    $region10: #{tpu_custom_call.1} parent=1 // pred_check
      _
    $region11: #{tpu_custom_call.1} parent=1 // pred_check_branch
      %23 = sbr.rel (0) target = $region13
    $region12: #{tpu_custom_call.1} parent=1 // pred_region
      _
    $region13: #{tpu_custom_call.1} parent=1 // pred_fallthru
      _
    // Predicated region
    $region14: #{tpu_custom_call.1} parent=1 // pred_check
      _
    $region15: #{tpu_custom_call.1} parent=1 // pred_check_branch
      %25 = sbr.rel (0) target = $region17
    $region16: #{tpu_custom_call.1} parent=1 // pred_region
      %26 = dma.done [#allocation5], 128
    $region17: #{tpu_custom_call.1} parent=1 // pred_fallthru
      _
    %p27 = scmp.eq.s32.totalorder 0, 0
    // Predicated region
    $region18: #{tpu_custom_call.1} parent=1 // pred_check
      %p28 = pneg %p27
    $region19: #{tpu_custom_call.1} parent=1 // pred_check_branch
      %30 = sbr.rel (%p28) target = $region21
    $region20: #{tpu_custom_call.1} parent=1 // pred_region
      %v31 = vld [vmem:[#allocation4] sm:$0xff]
      %vm32 = vcmask 261120
      %v33 = vsel %vm32, %v31, -inf
      %34 = vmax.xlane.f32.xlu0 %v33
      %v35 = vpop.xlane.xlu0 %34
      %v36 = vsub.f32 %v31, %v35
      %v37 = vmul.f32 %v36, 1.442695
      %v38 = vpow.pop %v37
      %v39 = vsel %vm32, %v38, 0.0
      %40 = vadd.xlane.f32.xlu0 %v39
      %v41 = vpop.xlane.xlu0 %40
      %v42 = vlog2.pop %v41
      %v43 = vmul.f32 %v42, 0.6931472
      %v44 = vld [vmem:[%s1] sm:$0xff]
      %v45 = vlaneseq
      %v46 = vand.u32 %v45, 127
      %47 = vset.pattern.permute.xlu0 0
      %48 = vperm.xlu0 %47, %v44
      %v49 = vpop.permute.xlu0 %48
      %vm50 = vcmp.eq.s32.totalorder %v46, %v49
      %v51 = vsel %vm50, 1, 0
      %v52 = vcvt.s32.f32 %v51
      %vm53 = vcmask 7168
      %v54 = vsel %vm53, %v43, 0.0
      %55 = vadd.xlane.f32.xlu0 %v54
      %v56 = vpop.xlane.xlu0 %55
      %v57 = vrot.slane %v56, 4
      %v58 = vadd.f32 %v56, %v57
      %v59 = vrot.slane %v58, 2
      %v60 = vadd.f32 %v58, %v59
      %v61 = vrot.slane %v60, 1
      %v62 = vadd.f32 %v60, %v61
      %s63 = vtos %v62
      %v64 = vmul.f32 %v52, %v36
      %v65 = vsel %vm32, %v64, 0.0
      %66 = vadd.xlane.f32.xlu0 %v65
      %v67 = vpop.xlane.xlu0 %66
      %v68 = vrot.slane %v67, 4
      %v69 = vadd.f32 %v67, %v68
      %v70 = vrot.slane %v69, 2
      %v71 = vadd.f32 %v69, %v70
      %v72 = vrot.slane %v71, 1
      %v73 = vadd.f32 %v71, %v72
      %s74 = vtos %v73
      %s75 = ssub.f32 %s63, %s74
      %s76 = smul.f32 %s75, 0.125
      %v77 = vmul.f32 %v31, %v31
      %v78 = vsel %vm32, %v77, 0.0
      %79 = vadd.xlane.f32.xlu0 %v78
      %v80 = vpop.xlane.xlu0 %79
      %v81 = vrot.slane %v80, 4
      %v82 = vadd.f32 %v80, %v81
      %v83 = vrot.slane %v82, 2
      %v84 = vadd.f32 %v82, %v83
      %v85 = vrot.slane %v84, 1
      %v86 = vadd.f32 %v84, %v85
      %s87 = vtos %v86
      %s88 = smul.f32 %s87, 0.00390625
      %s89 = smul.f32 %s88, 0.001
      %s90 = sadd.f32 %s76, %s89
      %s91 = scalar_lea.smem [#allocation2], 0
      %92 = sst [smem:[%s91]] %s90
      %93 = vst [vmem:[#allocation3] sm:$0x1] 0.0
    $region21: #{tpu_custom_call.1} parent=1 // pred_fallthru
      _
    %v94 = vld [vmem:[%s2] sm:$0xff]
    %v95 = vld [vmem:[%s2 + $0x8] sm:$0xff]
    %v96 = vld [vmem:[#allocation3] sm:$0x1]
    %v97 = vadd.f32 %v94, %v95
    %v98 = vrot.slane %v97, 4
    %v99 = vadd.f32 %v97, %v98
    %v100 = vrot.slane %v99, 2
    %v101 = vadd.f32 %v99, %v100
    %v102 = vrot.slane %v101, 1
    %v103 = vadd.f32 %v101, %v102
    %v104 = vadd.f32 %v96, %v103
    %105 = vst [vmem:[#allocation3] sm:$0x1] %v104
    // Predicated region
    $region22: #{tpu_custom_call.1} parent=1 // pred_check
      %p106 = pneg %p27
    $region23: #{tpu_custom_call.1} parent=1 // pred_check_branch
      %108 = sbr.rel (%p106) target = $region25
    $region24: #{tpu_custom_call.1} parent=1 // pred_region
      %v109 = vld [vmem:[#allocation3] sm:$0x1]
      %vm110 = vcmask 1040384
      %v111 = vsel %vm110, %v109, 0.0
      %112 = vadd.xlane.f32.xlu0 %v111
      %v113 = vpop.xlane.xlu0 %112
      %v114 = vrot.slane %v113, 4
      %v115 = vadd.f32 %v113, %v114
      %v116 = vrot.slane %v115, 2
      %v117 = vadd.f32 %v115, %v116
      %v118 = vrot.slane %v117, 1
      %v119 = vadd.f32 %v117, %v118
      %s120 = vtos %v119
      %s121 = smul.f32 %s120, 0.00048828125
      %s122 = sld [smem:[#allocation2]]
      %s123 = smul.f32 %s121, 0.005
      %s124 = sadd.f32 %s122, %s123
      %s125 = scalar_lea.smem [#allocation7], 0
      %126 = sst [smem:[%s125]] %s124
    $region25: #{tpu_custom_call.1} parent=1 // pred_fallthru
      _
    // Predicated region
    $region26: #{tpu_custom_call.1} parent=1 // pred_check
      _
    $region27: #{tpu_custom_call.1} parent=1 // pred_check_branch
      %128 = sbr.rel (0) target = $region29
    $region28: #{tpu_custom_call.1} parent=1 // pred_region
      %s130 = ssub.s32 16, 16
      %131 = vsyncadd [#allocation6], %s130
      %134 = dma.smem_to_hbm [#allocation7], 16, %s3, [#allocation6]
    $region29: #{tpu_custom_call.1} parent=1 // pred_fallthru
      _
    // Predicated region
    $region30: #{tpu_custom_call.1} parent=1 // pred_check
      _
    $region31: #{tpu_custom_call.1} parent=1 // pred_check_branch
      %136 = sbr.rel (0) target = $region33
    $region32: #{tpu_custom_call.1} parent=1 // pred_region
      %137 = dma.done [#allocation6], 16
    $region33: #{tpu_custom_call.1} parent=1 // pred_fallthru
      _
    %138 = sfence
    %139 = vsyncpa [#allocation5], 1
    %140 = vsyncpa [#allocation6], 1

</llo_original>
